<compile_context>
chip_gen: v7x
topology: tpu7x:2x2x1
jax: 0.10.0
libtpu: 0.0.40
codegen_flags: <defaults>
</compile_context>

<pallas_src>
import functools

import jax
import jax.numpy as jnp
from jax import lax
from jax.experimental import pallas as pl
from jax.experimental.pallas import tpu as pltpu

KH = KW = 3
EPS_IN = 1e-5          # InstanceNorm2d default eps
LRELU_SLOPE = 0.2


def convblock_kernel(x_ref, w_ref, b_ref, o_ref, *, H, W):
    """One batch sample per grid step, channel-major / flattened-spatial layout.

    x_ref: (Cin, H*W)        input sample, spatial flattened onto lanes
    w_ref: (KH*KW*Cout, Cin) conv weights; row t*Cout+co holds w[co, :, kh, kw]
    b_ref: (Cout, 1)         conv bias
    o_ref: (Cout, H*W)       output sample
    """
    HW = H * W
    Cout = o_ref.shape[0]

    x = x_ref[...].astype(jnp.float32)                         # (Cin, HW)

    # --- one fused MXU contraction over Cin for all 9 taps at once ---
    # y_all[t*Cout + co, p] = sum_c w[co, c, tap t] * x[c, p]
    y_all = jnp.dot(w_ref[...].astype(jnp.float32), x,
                    preferred_element_type=jnp.float32)        # (9*Cout, HW)

    # Flattened output-pixel coordinates, computed once.  W is a power of two,
    # so the column index is a cheap bitwise AND (no vector integer mod needed).
    pos = lax.broadcasted_iota(jnp.int32, (Cout, HW), 1)       # p = y*W + x
    col = jnp.bitwise_and(pos, W - 1)                          # x coordinate

    # --- combine taps: aligned sublane slice + XLU roll + boundary mask + add ---
    acc = jnp.zeros((Cout, HW), jnp.float32)
    for kh in range(KH):
        for kw in range(KW):
            dy, dx = kh - 1, kw - 1
            t = kh * KW + kw
            y_t = y_all[t * Cout:(t + 1) * Cout, :]            # sublane-aligned (Cout=8)
            d = dy * W + dx                                    # flattened displacement
            if d != 0:
                # y_t[p] <- y_all_t[(p + d) mod HW]; wrapped lanes are masked below.
                y_t = pltpu.roll(y_t, (-d) % HW, 1)
            conds = []
            if dy < 0:
                conds.append(pos >= W)                         # source row y-1 >= 0
            elif dy > 0:
                conds.append(pos < (H - 1) * W)                # source row y+1 <= H-1
            if dx < 0:
                conds.append(col >= 1)                         # source col x-1 >= 0
            elif dx > 0:
                conds.append(col < W - 1)                      # source col x+1 <= W-1
            if conds:
                m = conds[0]
                for extra in conds[1:]:
                    m = jnp.logical_and(m, extra)
                y_t = jnp.where(m, y_t, 0.0)
            acc = acc + y_t

    acc = acc + b_ref[...].astype(jnp.float32)                 # (Cout,1) -> lanes

    # --- InstanceNorm2d (affine=False): per-channel stats over H*W lanes ---
    mean = jnp.mean(acc, axis=1, keepdims=True)                # (Cout, 1)
    var = jnp.mean((acc - mean) ** 2, axis=1, keepdims=True)   # biased, like PyTorch
    y = (acc - mean) * lax.rsqrt(var + EPS_IN)

    # --- LeakyReLU(0.2) ---
    o_ref[...] = jnp.where(y >= 0, y, LRELU_SLOPE * y).astype(o_ref.dtype)


def conv_block_pallas(x_nchw, weight, bias):
    """x_nchw: (N, Cin, H, W); weight: (Cout, Cin, 3, 3) already spectrally normalized."""
    N, Cin, H, W = x_nchw.shape
    Cout = weight.shape[0]
    HW = H * W
    assert (W & (W - 1)) == 0, "kernel assumes W is a power of two (fast col index)"

    # Free, contiguous reshapes only — no transpose / pad passes over activations.
    x_flat = x_nchw.reshape(N, Cin, HW)
    # weight (Cout, Cin, KH, KW) -> (KH, KW, Cout, Cin) -> (KH*KW*Cout, Cin)   (tiny)
    w_all = jnp.transpose(weight, (2, 3, 0, 1)).reshape(KH * KW * Cout, Cin)
    b_col = bias.reshape(Cout, 1)

    kernel = functools.partial(convblock_kernel, H=H, W=W)

    out_flat = pl.pallas_call(
        kernel,
        out_shape=jax.ShapeDtypeStruct((N, Cout, HW), jnp.float32),
        grid_spec=pltpu.PrefetchScalarGridSpec(
            num_scalar_prefetch=0,
            grid=(N,),
            in_specs=[
                pl.BlockSpec((None, Cin, HW), lambda n: (n, 0, 0)),
                pl.BlockSpec((KH * KW * Cout, Cin), lambda n: (0, 0)),
                pl.BlockSpec((Cout, 1), lambda n: (0, 0)),
            ],
            out_specs=pl.BlockSpec((None, Cout, HW), lambda n: (n, 0, 0)),
        ),
        compiler_params=pltpu.CompilerParams(
            dimension_semantics=("parallel",)),   # v7x: one sample per TensorCore
    )(x_flat, w_all, b_col)

    return out_flat.reshape(N, Cout, H, W)


def spectral_normalize(weight, u0, n_power_iterations=1, eps=1e-12):
    """Mimics torch.nn.utils.spectral_norm at forward time (1 power iteration).

    Note: PyTorch carries the updated `u` buffer across forward passes; we restart
    from u0 every call (drift only matters after multiple forwards, not a kernel issue).
    """
    Cout = weight.shape[0]
    w_mat = weight.reshape(Cout, -1)
    u = u0 / (jnp.linalg.norm(u0) + eps)
    v = None
    for _ in range(n_power_iterations):
        v = w_mat.T @ u
        v = v / (jnp.linalg.norm(v) + eps)
        u = w_mat @ v
        u = u / (jnp.linalg.norm(u) + eps)
    sigma = u @ (w_mat @ v)
    return weight / sigma


def reference_jax(x_nchw, weight, bias):
    """Pure-JAX reference (conv -> instance norm -> leaky relu) for verification."""
    y = lax.conv_general_dilated(
        x_nchw.astype(jnp.float32), weight.astype(jnp.float32),
        window_strides=(1, 1), padding=((1, 1), (1, 1)),
        dimension_numbers=("NCHW", "OIHW", "NCHW"))
    y = y + bias[None, :, None, None]
    mean = jnp.mean(y, axis=(2, 3), keepdims=True)
    var = jnp.mean((y - mean) ** 2, axis=(2, 3), keepdims=True)
    y = (y - mean) * lax.rsqrt(var + EPS_IN)
    return jnp.where(y >= 0, y, LRELU_SLOPE * y)


if __name__ == "__main__":
    key = jax.random.PRNGKey(0)
    k_x, k_w, k_b, k_u = jax.random.split(key, 4)

    N, Cin, H, W = 2, 4, 16, 16
    Cout = 8

    x = jax.random.normal(k_x, (N, Cin, H, W), dtype=jnp.float32)
    w_orig = jax.random.normal(k_w, (Cout, Cin, KH, KW), dtype=jnp.float32) * 0.1
    b = jax.random.normal(k_b, (Cout,), dtype=jnp.float32) * 0.1
    u0 = jax.random.normal(k_u, (Cout,), dtype=jnp.float32)

    # Spectral norm of the conv weight (parameter glue, plain JAX).
    w_sn = spectral_normalize(w_orig, u0)

    out = conv_block_pallas(x, w_sn, b)
    out = jax.block_until_ready(out)

    ref = reference_jax(x, w_sn, b)
    assert out.shape == (N, Cout, H, W)
    err = float(jnp.max(jnp.abs(out - ref)))
    assert jnp.allclose(out, ref, rtol=1e-4, atol=1e-4), f"mismatch vs JAX reference (max abs err {err})"

    print("KERNEL_OK")
</pallas_src>

<mosaic_0001>
module attributes {stable_mosaic.version = 11 : i64} {
  func.func @convblock_kernel(%arg0: i32, %arg1: memref<1x4x256xf32, #tpu.memory_space<vmem>>, %arg2: memref<72x4xf32, #tpu.memory_space<vmem>>, %arg3: memref<8x1xf32, #tpu.memory_space<vmem>>, %arg4: memref<1x8x256xf32, #tpu.memory_space<vmem>>) attributes {dimension_semantics = [#tpu.dimension_semantics<parallel>], iteration_bounds = array<i64: 2>, scalar_prefetch = 0 : i64, scratch_operands = 0 : i64, tpu.core_type = #tpu.core_type<tc>, window_params = [{transform_indices = @transform_0, window_bounds = array<i64: 1, 4, 256>}, {pipeline_mode = #tpu.pipeline_mode<synchronous>, transform_indices = @transform_1, window_bounds = array<i64: 72, 4>}, {pipeline_mode = #tpu.pipeline_mode<synchronous>, transform_indices = @transform_2, window_bounds = array<i64: 8, 1>}, {transform_indices = @transform_3, window_bounds = array<i64: 1, 8, 256>}]} {
    %c0 = arith.constant 0 : index
    %c0_0 = arith.constant 0 : index
    %c0_1 = arith.constant 0 : index
    %0 = vector.load %arg1[%c0, %c0_0, %c0_1] : memref<1x4x256xf32, #tpu.memory_space<vmem>>, vector<1x4x256xf32>
    %1 = vector.shape_cast %0 : vector<1x4x256xf32> to vector<4x256xf32>
    %c0_2 = arith.constant 0 : index
    %c0_3 = arith.constant 0 : index
    %2 = vector.load %arg2[%c0_2, %c0_3] : memref<72x4xf32, #tpu.memory_space<vmem>>, vector<72x4xf32>
    %cst = arith.constant dense<0.000000e+00> : vector<72x256xf32>
    %3 = tpu.matmul %2, %1, %cst {dimension_numbers = #tpu.dot_dimension_numbers<[1], [0], [0], [1], [0, 0, 1, 1], [], []>} : vector<72x4xf32>, vector<4x256xf32>, vector<72x256xf32> -> vector<72x256xf32>
    %4 = tpu.iota {dimensions = array<i32: 1>} : vector<8x256xi32>
    %c15_i32 = arith.constant 15 : i32
    %5 = vector.broadcast %c15_i32 : i32 to vector<8x256xi32>
    %6 = arith.andi %4, %5 : vector<8x256xi32>
    %cst_4 = arith.constant 0.000000e+00 : f32
    %7 = vector.broadcast %cst_4 : f32 to vector<8x256xf32>
    %8 = vector.extract_strided_slice %3 {offsets = [0, 0], sizes = [8, 256], strides = [1, 1]} : vector<72x256xf32> to vector<8x256xf32>
    %c17_i32 = arith.constant 17 : i32
    %9 = tpu.dynamic_rotate %8 by %c17_i32 dim 1 : vector<8x256xf32>, i32 -> vector<8x256xf32>
    %c16_i32 = arith.constant 16 : i32
    %10 = vector.broadcast %c16_i32 : i32 to vector<8x256xi32>
    %11 = arith.cmpi sge, %4, %10 : vector<8x256xi32>
    %c1_i32 = arith.constant 1 : i32
    %12 = vector.broadcast %c1_i32 : i32 to vector<8x256xi32>
    %13 = arith.cmpi sge, %6, %12 : vector<8x256xi32>
    %14 = arith.andi %11, %13 : vector<8x256xi1>
    %cst_5 = arith.constant 0.000000e+00 : f32
    %15 = vector.broadcast %cst_5 : f32 to vector<8x256xf32>
    %16 = arith.select %14, %9, %15 : vector<8x256xi1>, vector<8x256xf32>
    %17 = arith.addf %7, %16 : vector<8x256xf32>
    %18 = vector.extract_strided_slice %3 {offsets = [8, 0], sizes = [8, 256], strides = [1, 1]} : vector<72x256xf32> to vector<8x256xf32>
    %c16_i32_6 = arith.constant 16 : i32
    %19 = tpu.dynamic_rotate %18 by %c16_i32_6 dim 1 : vector<8x256xf32>, i32 -> vector<8x256xf32>
    %c16_i32_7 = arith.constant 16 : i32
    %20 = vector.broadcast %c16_i32_7 : i32 to vector<8x256xi32>
    %21 = arith.cmpi sge, %4, %20 : vector<8x256xi32>
    %cst_8 = arith.constant 0.000000e+00 : f32
    %22 = vector.broadcast %cst_8 : f32 to vector<8x256xf32>
    %23 = arith.select %21, %19, %22 : vector<8x256xi1>, vector<8x256xf32>
    %24 = arith.addf %17, %23 : vector<8x256xf32>
    %25 = vector.extract_strided_slice %3 {offsets = [16, 0], sizes = [8, 256], strides = [1, 1]} : vector<72x256xf32> to vector<8x256xf32>
    %c15_i32_9 = arith.constant 15 : i32
    %26 = tpu.dynamic_rotate %25 by %c15_i32_9 dim 1 : vector<8x256xf32>, i32 -> vector<8x256xf32>
    %c16_i32_10 = arith.constant 16 : i32
    %27 = vector.broadcast %c16_i32_10 : i32 to vector<8x256xi32>
    %28 = arith.cmpi sge, %4, %27 : vector<8x256xi32>
    %c15_i32_11 = arith.constant 15 : i32
    %29 = vector.broadcast %c15_i32_11 : i32 to vector<8x256xi32>
    %30 = arith.cmpi slt, %6, %29 : vector<8x256xi32>
    %31 = arith.andi %28, %30 : vector<8x256xi1>
    %cst_12 = arith.constant 0.000000e+00 : f32
    %32 = vector.broadcast %cst_12 : f32 to vector<8x256xf32>
    %33 = arith.select %31, %26, %32 : vector<8x256xi1>, vector<8x256xf32>
    %34 = arith.addf %24, %33 : vector<8x256xf32>
    %35 = vector.extract_strided_slice %3 {offsets = [24, 0], sizes = [8, 256], strides = [1, 1]} : vector<72x256xf32> to vector<8x256xf32>
    %c1_i32_13 = arith.constant 1 : i32
    %36 = tpu.dynamic_rotate %35 by %c1_i32_13 dim 1 : vector<8x256xf32>, i32 -> vector<8x256xf32>
    %c1_i32_14 = arith.constant 1 : i32
    %37 = vector.broadcast %c1_i32_14 : i32 to vector<8x256xi32>
    %38 = arith.cmpi sge, %6, %37 : vector<8x256xi32>
    %cst_15 = arith.constant 0.000000e+00 : f32
    %39 = vector.broadcast %cst_15 : f32 to vector<8x256xf32>
    %40 = arith.select %38, %36, %39 : vector<8x256xi1>, vector<8x256xf32>
    %41 = arith.addf %34, %40 : vector<8x256xf32>
    %42 = vector.extract_strided_slice %3 {offsets = [32, 0], sizes = [8, 256], strides = [1, 1]} : vector<72x256xf32> to vector<8x256xf32>
    %43 = arith.addf %41, %42 : vector<8x256xf32>
    %44 = vector.extract_strided_slice %3 {offsets = [40, 0], sizes = [8, 256], strides = [1, 1]} : vector<72x256xf32> to vector<8x256xf32>
    %c255_i32 = arith.constant 255 : i32
    %45 = tpu.dynamic_rotate %44 by %c255_i32 dim 1 : vector<8x256xf32>, i32 -> vector<8x256xf32>
    %c15_i32_16 = arith.constant 15 : i32
    %46 = vector.broadcast %c15_i32_16 : i32 to vector<8x256xi32>
    %47 = arith.cmpi slt, %6, %46 : vector<8x256xi32>
    %cst_17 = arith.constant 0.000000e+00 : f32
    %48 = vector.broadcast %cst_17 : f32 to vector<8x256xf32>
    %49 = arith.select %47, %45, %48 : vector<8x256xi1>, vector<8x256xf32>
    %50 = arith.addf %43, %49 : vector<8x256xf32>
    %51 = vector.extract_strided_slice %3 {offsets = [48, 0], sizes = [8, 256], strides = [1, 1]} : vector<72x256xf32> to vector<8x256xf32>
    %c241_i32 = arith.constant 241 : i32
    %52 = tpu.dynamic_rotate %51 by %c241_i32 dim 1 : vector<8x256xf32>, i32 -> vector<8x256xf32>
    %c240_i32 = arith.constant 240 : i32
    %53 = vector.broadcast %c240_i32 : i32 to vector<8x256xi32>
    %54 = arith.cmpi slt, %4, %53 : vector<8x256xi32>
    %c1_i32_18 = arith.constant 1 : i32
    %55 = vector.broadcast %c1_i32_18 : i32 to vector<8x256xi32>
    %56 = arith.cmpi sge, %6, %55 : vector<8x256xi32>
    %57 = arith.andi %54, %56 : vector<8x256xi1>
    %cst_19 = arith.constant 0.000000e+00 : f32
    %58 = vector.broadcast %cst_19 : f32 to vector<8x256xf32>
    %59 = arith.select %57, %52, %58 : vector<8x256xi1>, vector<8x256xf32>
    %60 = arith.addf %50, %59 : vector<8x256xf32>
    %61 = vector.extract_strided_slice %3 {offsets = [56, 0], sizes = [8, 256], strides = [1, 1]} : vector<72x256xf32> to vector<8x256xf32>
    %c240_i32_20 = arith.constant 240 : i32
    %62 = tpu.dynamic_rotate %61 by %c240_i32_20 dim 1 : vector<8x256xf32>, i32 -> vector<8x256xf32>
    %c240_i32_21 = arith.constant 240 : i32
    %63 = vector.broadcast %c240_i32_21 : i32 to vector<8x256xi32>
    %64 = arith.cmpi slt, %4, %63 : vector<8x256xi32>
    %cst_22 = arith.constant 0.000000e+00 : f32
    %65 = vector.broadcast %cst_22 : f32 to vector<8x256xf32>
    %66 = arith.select %64, %62, %65 : vector<8x256xi1>, vector<8x256xf32>
    %67 = arith.addf %60, %66 : vector<8x256xf32>
    %68 = vector.extract_strided_slice %3 {offsets = [64, 0], sizes = [8, 256], strides = [1, 1]} : vector<72x256xf32> to vector<8x256xf32>
    %c239_i32 = arith.constant 239 : i32
    %69 = tpu.dynamic_rotate %68 by %c239_i32 dim 1 : vector<8x256xf32>, i32 -> vector<8x256xf32>
    %c240_i32_23 = arith.constant 240 : i32
    %70 = vector.broadcast %c240_i32_23 : i32 to vector<8x256xi32>
    %71 = arith.cmpi slt, %4, %70 : vector<8x256xi32>
    %c15_i32_24 = arith.constant 15 : i32
    %72 = vector.broadcast %c15_i32_24 : i32 to vector<8x256xi32>
    %73 = arith.cmpi slt, %6, %72 : vector<8x256xi32>
    %74 = arith.andi %71, %73 : vector<8x256xi1>
    %cst_25 = arith.constant 0.000000e+00 : f32
    %75 = vector.broadcast %cst_25 : f32 to vector<8x256xf32>
    %76 = arith.select %74, %69, %75 : vector<8x256xi1>, vector<8x256xf32>
    %77 = arith.addf %67, %76 : vector<8x256xf32>
    %c0_26 = arith.constant 0 : index
    %c0_27 = arith.constant 0 : index
    %78 = vector.load %arg3[%c0_26, %c0_27] : memref<8x1xf32, #tpu.memory_space<vmem>>, vector<8x1xf32>
    %79 = vector.broadcast %78 : vector<8x1xf32> to vector<8x256xf32>
    %80 = arith.addf %77, %79 : vector<8x256xf32>
    %cst_28 = arith.constant dense<0.000000e+00> : vector<8xf32>
    %81 = vector.multi_reduction <add>, %80, %cst_28 [1] : vector<8x256xf32> to vector<8xf32>
    %82 = vector.shape_cast %81 : vector<8xf32> to vector<8x1xf32>
    %cst_29 = arith.constant 2.560000e+02 : f32
    %83 = vector.broadcast %cst_29 : f32 to vector<8x1xf32>
    %84 = arith.divf %82, %83 : vector<8x1xf32>
    %85 = vector.broadcast %84 : vector<8x1xf32> to vector<8x256xf32>
    %86 = arith.subf %80, %85 : vector<8x256xf32>
    %87 = arith.mulf %86, %86 : vector<8x256xf32>
    %cst_30 = arith.constant dense<0.000000e+00> : vector<8xf32>
    %88 = vector.multi_reduction <add>, %87, %cst_30 [1] : vector<8x256xf32> to vector<8xf32>
    %89 = vector.shape_cast %88 : vector<8xf32> to vector<8x1xf32>
    %cst_31 = arith.constant 2.560000e+02 : f32
    %90 = vector.broadcast %cst_31 : f32 to vector<8x1xf32>
    %91 = arith.divf %89, %90 : vector<8x1xf32>
    %92 = vector.broadcast %84 : vector<8x1xf32> to vector<8x256xf32>
    %93 = arith.subf %80, %92 : vector<8x256xf32>
    %cst_32 = arith.constant 9.99999974E-6 : f32
    %94 = vector.broadcast %cst_32 : f32 to vector<8x1xf32>
    %95 = arith.addf %91, %94 : vector<8x1xf32>
    %96 = math.rsqrt %95 : vector<8x1xf32>
    %97 = vector.broadcast %96 : vector<8x1xf32> to vector<8x256xf32>
    %98 = arith.mulf %93, %97 : vector<8x256xf32>
    %cst_33 = arith.constant 0.000000e+00 : f32
    %99 = vector.broadcast %cst_33 : f32 to vector<8x256xf32>
    %100 = arith.cmpf oge, %98, %99 : vector<8x256xf32>
    %cst_34 = arith.constant 2.000000e-01 : f32
    %101 = vector.broadcast %cst_34 : f32 to vector<8x256xf32>
    %102 = arith.mulf %101, %98 : vector<8x256xf32>
    %103 = arith.select %100, %98, %102 : vector<8x256xi1>, vector<8x256xf32>
    %c0_35 = arith.constant 0 : index
    %c0_36 = arith.constant 0 : index
    %c0_37 = arith.constant 0 : index
    %104 = vector.load %arg4[%c0_35, %c0_36, %c0_37] : memref<1x8x256xf32, #tpu.memory_space<vmem>>, vector<1x8x256xf32>
    %105 = vector.shape_cast %104 : vector<1x8x256xf32> to vector<8x256xf32>
    %106 = vector.shape_cast %103 : vector<8x256xf32> to vector<1x8x256xf32>
    tpu.vector_store %arg4[%c0_35, %c0_36, %c0_37], %106 {strides = array<i32>} : memref<1x8x256xf32, #tpu.memory_space<vmem>>, vector<1x8x256xf32>,
    return
  }
  func.func @transform_0(%arg0: i32) -> (i32, i32, i32) {
    %c0_i32 = arith.constant 0 : i32
    %c0_i32_0 = arith.constant 0 : i32
    %c0_i32_1 = arith.constant 0 : i32
    return %arg0, %c0_i32, %c0_i32_0 : i32, i32, i32
  }
  func.func @transform_1(%arg0: i32) -> (i32, i32) {
    %c0_i32 = arith.constant 0 : i32
    %c0_i32_0 = arith.constant 0 : i32
    %c0_i32_1 = arith.constant 0 : i32
    return %c0_i32, %c0_i32_0 : i32, i32
  }
  func.func @transform_2(%arg0: i32) -> (i32, i32) {
    %c0_i32 = arith.constant 0 : i32
    %c0_i32_0 = arith.constant 0 : i32
    %c0_i32_1 = arith.constant 0 : i32
    return %c0_i32, %c0_i32_0 : i32, i32
  }
  func.func @transform_3(%arg0: i32) -> (i32, i32, i32) {
    %c0_i32 = arith.constant 0 : i32
    %c0_i32_0 = arith.constant 0 : i32
    %c0_i32_1 = arith.constant 0 : i32
    return %arg0, %c0_i32, %c0_i32_0 : i32, i32, i32
  }
}

</mosaic_0001>

<llo_original>
// kernel: tpu_custom_call.1
$region0: #{tpu_custom_call.1}
  #allocation0 [shape = 'u32[]', space=smem, size = 0x4, offset = 0x4, fixed_abs, tag = 'smem constant byte address 0x4 - core index']
  #allocation1 [shape = 'u32[144,128]{1,0:T(1,128)}', space=vmem, size = 0x12000, scoped, tag = 'internal scratch']
  %s0 = inlined_call_operand.vmem [shape: f32[2,4,256], index: 0, kind: input, shape index: {}]
  %s1 = inlined_call_operand.vmem [shape: f32[72,4], index: 1, kind: input, shape index: {}]
  %s2 = inlined_call_operand.vmem [shape: f32[8,1], index: 2, kind: input, shape index: {}]
  %s3 = inlined_call_operand.hbm [shape: f32[2,8,256], index: 3, kind: output, shape index: {}]
  %s4 = sld [smem:[#allocation0]]
  $region45: #{tpu_custom_call.1} parent=0
    _
  %s6 = ssub.s32 1, %s4
  %s7 = scalar_select 0, %s6, %s4
  $region1: #{tpu_custom_call.1} parent=0
    #allocation2 [shape = 'u8[16384]{0}', space=vmem, size = 0x4000, scoped, tag = 'output window, operand 0']
    #allocation3 [shape = 's32[2]{0}', space=sflag, size = 0x8, scoped, tag = 'scoped memory for tpu_custom_call.1']
    %8 = vsyncpa [#allocation3], 0
    %s9 = scalar_lea.sflag [#allocation3], 1
    %10 = vsyncpa %s9, 0
    loop: start=0, step=1, limit=4
    $region2: #{tpu_custom_call.1} parent=1 // loop_pre_header
      _
    $region3: #{tpu_custom_call.1} parent=1 // loop_header
      %s12 = sphi 0, %s16
      %p13 = scmp.ge.s32.totalorder %s12, 4
      %s22 = sphi 0, %s24
      %s25 = sphi 0, %s22
      %s26 = sphi 0, %s25
      %s42 = sphi 0, %s26
      %s46 = sphi 0, %s46
      %s48 = sphi 0, %s46
      %s49 = sphi 0, %s48
      %s63 = sphi 0, %s49
      %s67 = sphi 0, %s67
      %s69 = sphi 0, %s67
      %s70 = sphi 0, %s69
      %s84 = sphi 0, %s70
      %s90 = sphi 0, %s92
      %s93 = sphi 0, %s90
      %s94 = sphi 0, %s93
      %s110 = sphi 0, %s94
    $region4: #{tpu_custom_call.1} parent=1 // loop_header_branch
      %15 = sbr.rel (%p13) target = $region8
    $region5: #{tpu_custom_call.1} parent=1 // loop_body
      %s17 = ssub.s32 %s12, 1
      %s18 = ssub.s32 %s12, 2
      %s19 = sadd.s32 %s12, 1
      %s20 = ssub.s32 %s12, %s19
      %p21 = scmp.eq.s32.totalorder %s20, 0
      %s23 = sadd.s32 %s22, 1
      %s24 = scalar_select %p21, %s22, %s23
      %p27 = pneg %p21
      %p28 = scmp.eq.s32.totalorder %s12, 1
      %p29 = por %p27, %p28
      %p30 = scmp.ne.s32.totalorder %s22, %s25
      %p31 = scmp.eq.s32.totalorder %s12, 0
      %p32 = por %p30, %p31
      %p33 = scmp.ne.s32.totalorder %s22, %s25
      %p34 = scmp.eq.s32.totalorder %s17, 1
      %p35 = por %p33, %p34
      %p36 = scmp.ne.s32.totalorder %s25, %s26
      %p37 = scmp.eq.s32.totalorder %s17, 0
      %p38 = por %p36, %p37
      %p39 = scmp.ne.s32.totalorder %s25, %s26
      %p40 = scmp.eq.s32.totalorder %s18, 1
      %p41 = por %p39, %p40
      %p43 = scmp.ne.s32.totalorder %s26, %s42
      %p44 = scmp.eq.s32.totalorder %s18, 0
      %p45 = por %p43, %p44
      %s47 = sadd.s32 %s46, 1
      %p50 = scmp.eq.s32.totalorder %s12, 1
      %p51 = scmp.ne.s32.totalorder %s46, %s48
      %p52 = scmp.eq.s32.totalorder %s12, 0
      %p53 = por %p51, %p52
      %p54 = scmp.ne.s32.totalorder %s46, %s48
      %p55 = scmp.eq.s32.totalorder %s17, 1
      %p56 = por %p54, %p55
      %p57 = scmp.ne.s32.totalorder %s48, %s49
      %p58 = scmp.eq.s32.totalorder %s17, 0
      %p59 = por %p57, %p58
      %p60 = scmp.ne.s32.totalorder %s48, %s49
      %p61 = scmp.eq.s32.totalorder %s18, 1
      %p62 = por %p60, %p61
      %p64 = scmp.ne.s32.totalorder %s49, %s63
      %p65 = scmp.eq.s32.totalorder %s18, 0
      %p66 = por %p64, %p65
      %s68 = sadd.s32 %s67, 1
      %p71 = scmp.eq.s32.totalorder %s12, 1
      %p72 = scmp.ne.s32.totalorder %s67, %s69
      %p73 = scmp.eq.s32.totalorder %s12, 0
      %p74 = por %p72, %p73
      %p75 = scmp.ne.s32.totalorder %s67, %s69
      %p76 = scmp.eq.s32.totalorder %s17, 1
      %p77 = por %p75, %p76
      %p78 = scmp.ne.s32.totalorder %s69, %s70
      %p79 = scmp.eq.s32.totalorder %s17, 0
      %p80 = por %p78, %p79
      %p81 = scmp.ne.s32.totalorder %s69, %s70
      %p82 = scmp.eq.s32.totalorder %s18, 1
      %p83 = por %p81, %p82
      %p85 = scmp.ne.s32.totalorder %s70, %s84
      %p86 = scmp.eq.s32.totalorder %s18, 0
      %p87 = por %p85, %p86
      %s88 = ssub.s32 %s12, %s19
      %p89 = scmp.eq.s32.totalorder %s88, 0
      %s91 = sadd.s32 %s90, 1
      %s92 = scalar_select %p89, %s90, %s91
      %p95 = pneg %p89
      %p96 = scmp.eq.s32.totalorder %s12, 1
      %p97 = por %p95, %p96
      %p98 = scmp.ne.s32.totalorder %s90, %s93
      %p99 = scmp.eq.s32.totalorder %s12, 0
      %p100 = por %p98, %p99
      %p101 = scmp.ne.s32.totalorder %s90, %s93
      %p102 = scmp.eq.s32.totalorder %s17, 1
      %p103 = por %p101, %p102
      %p104 = scmp.ne.s32.totalorder %s93, %s94
      %p105 = scmp.eq.s32.totalorder %s17, 0
      %p106 = por %p104, %p105
      %p107 = scmp.ne.s32.totalorder %s93, %s94
      %p108 = scmp.eq.s32.totalorder %s18, 1
      %p109 = por %p107, %p108
      %p111 = scmp.ne.s32.totalorder %s94, %s110
      %p112 = scmp.eq.s32.totalorder %s18, 0
      %p113 = por %p111, %p112
      %p114 = scmp.le.s32.totalorder 1, %s12
      %p115 = scmp.lt.s32.totalorder %s12, 3
      %p116 = pnand %p114, %p115
      %p117 = pneg %p116
      // Predicated region
      $region9: #{tpu_custom_call.1} parent=5 // pred_check
        _
      $region10: #{tpu_custom_call.1} parent=5 // pred_check_branch
        %119 = sbr.rel (%p116) target = $region12
      $region11: #{tpu_custom_call.1} parent=5 // pred_region
        %s120 = ssub.s32 %s12, 1
        // Predicated region
        $region13: #{tpu_custom_call.1} parent=11 // pred_check
          %p121 = pneg %p59
        $region14: #{tpu_custom_call.1} parent=11 // pred_check_branch
          %123 = sbr.rel (%p121) target = $region16
        $region15: #{tpu_custom_call.1} parent=11 // pred_region
          _
        $region16: #{tpu_custom_call.1} parent=11 // pred_fallthru
          _
        // Predicated region
        $region17: #{tpu_custom_call.1} parent=11 // pred_check
          %p124 = pneg %p80
        $region18: #{tpu_custom_call.1} parent=11 // pred_check_branch
          %126 = sbr.rel (%p124) target = $region20
        $region19: #{tpu_custom_call.1} parent=11 // pred_region
          _
        $region20: #{tpu_custom_call.1} parent=11 // pred_fallthru
          _
      $region12: #{tpu_custom_call.1} parent=5 // pred_fallthru
        _
      %p127 = scmp.lt.s32.totalorder %s12, 2
      // Predicated region
      $region21: #{tpu_custom_call.1} parent=5 // pred_check
        %p128 = pneg %p127
      $region22: #{tpu_custom_call.1} parent=5 // pred_check_branch
        %130 = sbr.rel (%p128) target = $region24
      $region23: #{tpu_custom_call.1} parent=5 // pred_region
        // Predicated region
        $region25: #{tpu_custom_call.1} parent=23 // pred_check
          %p131 = pneg %p32
        $region26: #{tpu_custom_call.1} parent=23 // pred_check_branch
          %133 = sbr.rel (%p131) target = $region28
        $region27: #{tpu_custom_call.1} parent=23 // pred_region
          %p134 = scmp.lt.s32.totalorder %s12, 1
          %s135 = scalar_select %p134, %s12, 1
          %s136 = smul.addr %s135, 2
          %s137 = smul.addr %s136, 4
          %s138 = scalar_lea.vmem %s0, %s137
        $region28: #{tpu_custom_call.1} parent=23 // pred_fallthru
          _
      $region24: #{tpu_custom_call.1} parent=5 // pred_fallthru
        _
      %p139 = scmp.le.s32.totalorder 1, %s12
      %p140 = scmp.lt.s32.totalorder %s12, 3
      %p141 = pnand %p139, %p140
      %p142 = pneg %p141
      // Predicated region
      $region29: #{tpu_custom_call.1} parent=5 // pred_check
        _
      $region30: #{tpu_custom_call.1} parent=5 // pred_check_branch
        %144 = sbr.rel (%p141) target = $region32
      $region31: #{tpu_custom_call.1} parent=5 // pred_region
        %s145 = ssub.s32 %s12, 1
        %p146 = scmp.lt.s32.totalorder %s17, 1
        %s147 = scalar_select %p146, %s17, 1
        %s148 = smul.addr %s147, 2
        %s149 = smul.addr %s148, 4
        %s150 = scalar_lea.vmem %s0, %s149
        %p151 = pneg %p38
        %p152 = pneg %p35
        %p153 = pneg %p59
        %p154 = pneg %p56
        %p155 = pneg %p80
        %p156 = pneg %p77
        %p157 = pneg %p106
        %p158 = pneg %p103
        %s159 = sand.u32 %s93, 1
        %s160 = scalar_lea.sflag [#allocation3], %s159
        %s161 = sand.u32 %s93, 1
        %s162 = smul.addr %s161, 16
        %s163 = scalar_lea.vmem [#allocation2], %s162
        %p164 = scmp.lt.s32.totalorder %s17, 1
        %s165 = scalar_select %p164, %s17, 1
        %s166 = smul.addr %s165, 2
        %s167 = smul.addr %s166, 4
        %s168 = scalar_lea.vmem %s0, %s167
        %v169 = vld [vmem:[%s168] sm:$0xff]
        %v170 = vld [vmem:[%s1] sm:$0xff]
        %v171 = vld [vmem:[%s1 + $0x8] sm:$0xff]
        %v172 = vld [vmem:[%s1 + $0x10] sm:$0xff]
        %v173 = vld [vmem:[%s1 + $0x18] sm:$0xff]
        %v174 = vld [vmem:[%s1 + $0x20] sm:$0xff]
        %v175 = vld [vmem:[%s1 + $0x28] sm:$0xff]
        %v176 = vld [vmem:[%s1 + $0x30] sm:$0xff]
        %v177 = vld [vmem:[%s1 + $0x38] sm:$0xff]
        %v178 = vld [vmem:[%s1 + $0x40] sm:$0xff]
        %v180 = vcombine.high %v169, %v169
        %vm181 = vcmask 31744
        %v183 = vsel %vm181, %v170, 0
        %v186 = vsel %vm181, %v171, 0
        %v189 = vsel %vm181, %v172, 0
        %v192 = vsel %vm181, %v173, 0
        %v195 = vsel %vm181, %v174, 0
        %v198 = vsel %vm181, %v175, 0
        %v201 = vsel %vm181, %v176, 0
        %v204 = vsel %vm181, %v177, 0
        %v207 = vsel %vm181, %v178, 0
        %vm209 = vcmask 1043456
        %v210 = vsel %vm209, %v169, 0
        %v212 = vsel %vm209, %v180, 0
        %214 = vmatprep.subr.mxu0 %v212
        %215 = vmatpush1.msra.mxu0 %v210
        %216 = vmatprep.subr.mxu0 0.0
        %217 = vmatpush1.msra.mxu0 0.0
        %218 = vmatprep.subr.mxu0 0.0
        %219 = vmatpush1.msra.mxu0 0.0
        %220 = vmatprep.subr.mxu0 0.0
        %221 = vmatpush1.msra.mxu0 0.0
        %222 = vmatprep.subr.mxu0 0.0
        %223 = vmatpush1.msra.mxu0 0.0
        %224 = vmatprep.subr.mxu0 0.0
        %225 = vmatpush1.msra.mxu0 0.0
        %226 = vmatprep.subr.mxu0 0.0
        %227 = vmatpush1.msra.mxu0 0.0
        %228 = vmatprep.subr.mxu0 0.0
        %229 = vmatpush1.msra.mxu0 0.0
        %230 = vmatprep.subr.mxu0 0.0
        %231 = vmatpush1.msra.mxu0 0.0
        %232 = vmatprep.subr.mxu0 0.0
        %233 = vmatpush1.msra.mxu0 0.0
        %234 = vmatprep.subr.mxu0 0.0
        %235 = vmatpush1.msra.mxu0 0.0
        %236 = vmatprep.subr.mxu0 0.0
        %237 = vmatpush1.msra.mxu0 0.0
        %238 = vmatprep.subr.mxu0 0.0
        %239 = vmatpush1.msra.mxu0 0.0
        %240 = vmatprep.subr.mxu0 0.0
        %241 = vmatpush1.msra.mxu0 0.0
        %242 = vmatprep.subr.mxu0 0.0
        %243 = vmatpush1.msra.mxu0 0.0
        %244 = vmatprep.subr.mxu0 0.0
        %245 = vmatpush1.msra.mxu0 0.0
        %246 = vmatprep.subr.mxu0 0.0
        %247 = vmatpush1.msra.mxu0 0.0
        %248 = vmatprep.subr.mxu0 0.0
        %249 = vmatpush1.msra.mxu0 0.0
        %250 = vmatprep.subr.mxu0 0.0
        %251 = vmatpush1.msra.mxu0 0.0
        %252 = vmatprep.subr.mxu0 0.0
        %253 = vmatpush1.msra.mxu0 0.0
        %254 = vmatprep.subr.mxu0 0.0
        %255 = vmatpush1.msra.mxu0 0.0
        %256 = vmatprep.subr.mxu0 0.0
        %257 = vmatpush1.msra.mxu0 0.0
        %258 = vmatprep.subr.mxu0 0.0
        %259 = vmatpush1.msra.mxu0 0.0
        %260 = vmatprep.subr.mxu0 0.0
        %261 = vmatpush1.msra.mxu0 0.0
        %262 = vmatprep.subr.mxu0 0.0
        %263 = vmatpush1.msra.mxu0 0.0
        %264 = vmatprep.subr.mxu0 0.0
        %265 = vmatpush1.msra.mxu0 0.0
        %266 = vmatprep.subr.mxu0 0.0
        %267 = vmatpush1.msra.mxu0 0.0
        %268 = vmatprep.subr.mxu0 0.0
        %269 = vmatpush1.msra.mxu0 0.0
        %270 = vmatprep.subr.mxu0 0.0
        %271 = vmatpush1.msra.mxu0 0.0
        %272 = vmatprep.subr.mxu0 0.0
        %273 = vmatpush1.msra.mxu0 0.0
        %274 = vmatprep.subr.mxu0 0.0
        %275 = vmatpush1.msra.mxu0 0.0
        %276 = vmatprep.subr.mxu0 0.0
        %277 = vmatpush1.msra.mxu0 0.0
        %278 = vmatprep.mubr.f32.mxu0 0.0
        %279 = vmatmul.mubr.f32.gmra.mrb[0].mxu0 %v183
        %v280 = vpop.f32.mrb[0].mxu0
        %v281 = vadd.f32 0.0, %v280
        %v282 = vpop.f32.mrb[0].mxu0
        %v283 = vadd.f32 0.0, %v282
        %284 = vmatprep.mubr.f32.mxu0 0.0
        %285 = vmatmul.mubr.f32.gmra.mrb[0].mxu0 %v186
        %v286 = vpop.f32.mrb[0].mxu0
        %v287 = vadd.f32 0.0, %v286
        %v288 = vpop.f32.mrb[0].mxu0
        %v289 = vadd.f32 0.0, %v288
        %290 = vmatprep.mubr.f32.mxu0 0.0
        %291 = vmatmul.mubr.f32.gmra.mrb[0].mxu0 %v189
        %v292 = vpop.f32.mrb[0].mxu0
        %v293 = vadd.f32 0.0, %v292
        %v294 = vpop.f32.mrb[0].mxu0
        %v295 = vadd.f32 0.0, %v294
        %296 = vmatprep.mubr.f32.mxu0 0.0
        %297 = vmatmul.mubr.f32.gmra.mrb[0].mxu0 %v192
        %v298 = vpop.f32.mrb[0].mxu0
        %v299 = vadd.f32 0.0, %v298
        %v300 = vpop.f32.mrb[0].mxu0
        %v301 = vadd.f32 0.0, %v300
        %302 = vmatprep.mubr.f32.mxu0 0.0
        %303 = vmatmul.mubr.f32.gmra.mrb[0].mxu0 %v195
        %v304 = vpop.f32.mrb[0].mxu0
        %v305 = vadd.f32 0.0, %v304
        %v306 = vpop.f32.mrb[0].mxu0
        %v307 = vadd.f32 0.0, %v306
        %308 = vmatprep.mubr.f32.mxu0 0.0
        %309 = vmatmul.mubr.f32.gmra.mrb[0].mxu0 %v198
        %v310 = vpop.f32.mrb[0].mxu0
        %v311 = vadd.f32 0.0, %v310
        %v312 = vpop.f32.mrb[0].mxu0
        %v313 = vadd.f32 0.0, %v312
        %314 = vmatprep.mubr.f32.mxu0 0.0
        %315 = vmatmul.mubr.f32.gmra.mrb[0].mxu0 %v201
        %v316 = vpop.f32.mrb[0].mxu0
        %v317 = vadd.f32 0.0, %v316
        %v318 = vpop.f32.mrb[0].mxu0
        %v319 = vadd.f32 0.0, %v318
        %320 = vmatprep.mubr.f32.mxu0 0.0
        %321 = vmatmul.mubr.f32.gmra.mrb[0].mxu0 %v204
        %v322 = vpop.f32.mrb[0].mxu0
        %v323 = vadd.f32 0.0, %v322
        %v324 = vpop.f32.mrb[0].mxu0
        %v325 = vadd.f32 0.0, %v324
        %326 = vmatprep.mubr.f32.mxu0 0.0
        %327 = vmatmul.mubr.f32.gmra.mrb[0].mxu0 %v207
        %v328 = vpop.f32.mrb[0].mxu0
        %v329 = vadd.f32 0.0, %v328
        %v330 = vpop.f32.mrb[0].mxu0
        %v331 = vadd.f32 0.0, %v330
        %332 = vdwg.mxu0
        %v333 = vlaneseq
        %v334 = vand.u32 %v333, 127
        %v335 = vadd.s32 %v334, 128
        %v336 = vand.u32 %v334, 15
        %v337 = vand.u32 %v335, 15
        %338 = vrot.lane.b32.xlu0 %v281, 17
        %v339 = vpop.permute.xlu0 %338
        %340 = vrot.lane.b32.xlu0 %v283, 17
        %v341 = vpop.permute.xlu0 %340
        %vm342 = vcmp.lt.s32.totalorder %v334, 17
        %v343 = vsel %vm342, %v339, %v341
        %v344 = vsel %vm342, %v341, %v339
        %vm345 = vcmp.ge.s32.totalorder %v334, 16
        %vm346 = vcmp.ge.s32.totalorder %v335, 16
        %vm347 = vcmp.ge.s32.totalorder %v336, 1
        %vm348 = vcmp.ge.s32.totalorder %v337, 1
        %vm349 = vmand %vm345, %vm347
        %vm350 = vmand %vm346, %vm348
        %v351 = vsel %vm349, %v344, 0.0
        %v352 = vsel %vm350, %v343, 0.0
        %v353 = vadd.f32 %v351, 0.0
        %v354 = vadd.f32 %v352, 0.0
        %355 = vrot.lane.b32.xlu0 %v287, 16
        %v356 = vpop.permute.xlu0 %355
        %357 = vrot.lane.b32.xlu0 %v289, 16
        %v358 = vpop.permute.xlu0 %357
        %vm359 = vcmp.lt.s32.totalorder %v334, 16
        %v360 = vsel %vm359, %v356, %v358
        %v361 = vsel %vm359, %v358, %v356
        %v362 = vsel %vm345, %v361, 0.0
        %v363 = vsel %vm346, %v360, 0.0
        %v364 = vadd.f32 %v353, %v362
        %v365 = vadd.f32 %v354, %v363
        %366 = vrot.lane.b32.xlu0 %v293, 15
        %v367 = vpop.permute.xlu0 %366
        %368 = vrot.lane.b32.xlu0 %v295, 15
        %v369 = vpop.permute.xlu0 %368
        %vm370 = vcmp.lt.s32.totalorder %v334, 15
        %v371 = vsel %vm370, %v367, %v369
        %v372 = vsel %vm370, %v369, %v367
        %vm373 = vcmp.lt.s32.totalorder %v336, 15
        %vm374 = vcmp.lt.s32.totalorder %v337, 15
        %vm375 = vmand %vm345, %vm373
        %vm376 = vmand %vm346, %vm374
        %v377 = vsel %vm375, %v372, 0.0
        %v378 = vsel %vm376, %v371, 0.0
        %v379 = vadd.f32 %v364, %v377
        %v380 = vadd.f32 %v365, %v378
        %381 = vrot.lane.b32.xlu0 %v299, 1
        %v382 = vpop.permute.xlu0 %381
        %383 = vrot.lane.b32.xlu0 %v301, 1
        %v384 = vpop.permute.xlu0 %383
        %vm385 = vcmp.lt.s32.totalorder %v334, 1
        %v386 = vsel %vm385, %v382, %v384
        %v387 = vsel %vm385, %v384, %v382
        %v388 = vsel %vm347, %v387, 0.0
        %v389 = vsel %vm348, %v386, 0.0
        %v390 = vadd.f32 %v379, %v388
        %v391 = vadd.f32 %v380, %v389
        %v392 = vadd.f32 %v390, %v305
        %v393 = vadd.f32 %v391, %v307
        %394 = vrot.lane.b32.xlu0 %v311, 127
        %v395 = vpop.permute.xlu0 %394
        %396 = vrot.lane.b32.xlu0 %v313, 127
        %v397 = vpop.permute.xlu0 %396
        %vm398 = vcmp.lt.s32.totalorder %v334, 127
        %v399 = vsel %vm398, %v395, %v397
        %v400 = vsel %vm398, %v397, %v395
        %v401 = vsel %vm373, %v399, 0.0
        %v402 = vsel %vm374, %v400, 0.0
        %v403 = vadd.f32 %v392, %v401
        %v404 = vadd.f32 %v393, %v402
        %405 = vrot.lane.b32.xlu0 %v317, 113
        %v406 = vpop.permute.xlu0 %405
        %407 = vrot.lane.b32.xlu0 %v319, 113
        %v408 = vpop.permute.xlu0 %407
        %vm409 = vcmp.lt.s32.totalorder %v334, 113
        %v410 = vsel %vm409, %v406, %v408
        %v411 = vsel %vm409, %v408, %v406
        %vm412 = vcmp.lt.s32.totalorder %v334, 240
        %vm413 = vcmp.lt.s32.totalorder %v335, 240
        %vm414 = vmand %vm412, %vm347
        %vm415 = vmand %vm413, %vm348
        %v416 = vsel %vm414, %v410, 0.0
        %v417 = vsel %vm415, %v411, 0.0
        %v418 = vadd.f32 %v403, %v416
        %v419 = vadd.f32 %v404, %v417
        %420 = vrot.lane.b32.xlu0 %v323, 112
        %v421 = vpop.permute.xlu0 %420
        %422 = vrot.lane.b32.xlu0 %v325, 112
        %v423 = vpop.permute.xlu0 %422
        %vm424 = vcmp.lt.s32.totalorder %v334, 112
        %v425 = vsel %vm424, %v421, %v423
        %v426 = vsel %vm424, %v423, %v421
        %v427 = vsel %vm412, %v425, 0.0
        %v428 = vsel %vm413, %v426, 0.0
        %v429 = vadd.f32 %v418, %v427
        %v430 = vadd.f32 %v419, %v428
        %431 = vrot.lane.b32.xlu0 %v329, 111
        %v432 = vpop.permute.xlu0 %431
        %433 = vrot.lane.b32.xlu0 %v331, 111
        %v434 = vpop.permute.xlu0 %433
        %vm435 = vcmp.lt.s32.totalorder %v334, 111
        %v436 = vsel %vm435, %v432, %v434
        %v437 = vsel %vm435, %v434, %v432
        %vm438 = vmand %vm412, %vm373
        %vm439 = vmand %vm413, %vm374
        %v440 = vsel %vm438, %v436, 0.0
        %v441 = vsel %vm439, %v437, 0.0
        %v442 = vadd.f32 %v429, %v440
        %v443 = vadd.f32 %v430, %v441
        %v444 = vld [vmem:[%s2] sm:$0xff]
        %446 = vset.pattern.permute.xlu0 0
        %447 = vperm.xlu0 %446, %v444
        %v448 = vpop.permute.xlu0 %447
        %v450 = vadd.f32 %v442, %v448
        %v451 = vadd.f32 %v443, %v448
        %v452 = vadd.f32 %v450, %v451
        %453 = vadd.xlane.f32.xlu0 %v452
        %v454 = vpop.xlane.xlu0 %453
        %v455 = vrcp.pop 256.0
        %v456 = vmul.f32 %v454, %v455
        %v457 = vsub.f32 %v450, %v456
        %v458 = vsub.f32 %v451, %v456
        %v459 = vmul.f32 %v457, %v457
        %v460 = vmul.f32 %v458, %v458
        %v461 = vadd.f32 %v459, %v460
        %462 = vadd.xlane.f32.xlu0 %v461
        %v463 = vpop.xlane.xlu0 %462
        %v464 = vmul.f32 %v463, %v455
        %v465 = vadd.f32 %v464, 1e-05
        %v466 = vrsqrt.pop %v465
        %v467 = vmul.f32 %v457, %v466
        %v468 = vmul.f32 %v458, %v466
        %vm469 = vcmp.ge.f32.partialorder %v467, 0.0
        %vm470 = vcmp.ge.f32.partialorder %v468, 0.0
        %v471 = vmul.f32 %v467, 0.2
        %v472 = vmul.f32 %v468, 0.2
        %v473 = vsel %vm469, %v467, %v471
        %v474 = vsel %vm470, %v468, %v472
        %475 = vst [vmem:[%s163] sm:$0xff] %v473
        %476 = vst [vmem:[%s163 + $0x8] sm:$0xff] %v474
        %s477 = sand.u32 %s93, 1
        %s478 = scalar_lea.sflag [#allocation3], %s477
        %s479 = sand.u32 %s93, 1
        %s480 = smul.addr %s479, 16
        %s481 = scalar_lea.vmem [#allocation2], %s480
        // Predicated region
        $region33: #{tpu_custom_call.1} parent=31 // pred_check
          %p482 = pneg %p103
        $region34: #{tpu_custom_call.1} parent=31 // pred_check_branch
          %484 = sbr.rel (%p482) target = $region36
        $region35: #{tpu_custom_call.1} parent=31 // pred_region
          %s486 = ssub.s32 256, 256
          %487 = vsyncadd %s478, %s486
          %s488 = smul.addr %s17, 2
          %s489 = smul.addr %s488, 128
          %s490 = scalar_lea.hbm %s3, %s489
          %s492 = sshll.u32 %s481, 4
          %s493 = int_to_ptr.vmem [resolvable:$true] %s492
          %495 = dma.vmem_to_hbm [thread:$0]  %s493, 256, %s490, %s478
        $region36: #{tpu_custom_call.1} parent=31 // pred_fallthru
          _
      $region32: #{tpu_custom_call.1} parent=5 // pred_fallthru
        _
      %p496 = scmp.le.s32.totalorder 2, %s12
      // Predicated region
      $region37: #{tpu_custom_call.1} parent=5 // pred_check
        %p497 = pneg %p496
      $region38: #{tpu_custom_call.1} parent=5 // pred_check_branch
        %499 = sbr.rel (%p497) target = $region40
      $region39: #{tpu_custom_call.1} parent=5 // pred_region
        %s500 = ssub.s32 %s12, 2
        // Predicated region
        $region41: #{tpu_custom_call.1} parent=39 // pred_check
          %p501 = pneg %p109
        $region42: #{tpu_custom_call.1} parent=39 // pred_check_branch
          %503 = sbr.rel (%p501) target = $region44
        $region43: #{tpu_custom_call.1} parent=39 // pred_region
          %s504 = sand.u32 %s94, 1
          %s505 = scalar_lea.sflag [#allocation3], %s504
          %s506 = sand.u32 %s94, 1
          %s507 = smul.addr %s506, 16
          %s508 = scalar_lea.vmem [#allocation2], %s507
          %509 = dma.done %s505, 256
        $region44: #{tpu_custom_call.1} parent=39 // pred_fallthru
          _
      $region40: #{tpu_custom_call.1} parent=5 // pred_fallthru
        _
    $region6: #{tpu_custom_call.1} parent=1 // loop_footer
      %s16 = sadd.s32 1, %s12
    $region7: #{tpu_custom_call.1} parent=1 // loop_footer_branch
      %11 = sbr.rel target = $region3
    $region8: #{tpu_custom_call.1} parent=1 // loop_exit
      _
    %510 = vsyncpa [#allocation3], 1
    %s511 = scalar_lea.sflag [#allocation3], 1
    %512 = vsyncpa %s511, 1

</llo_original>
